<compile_context>
chip_gen: v7x
topology: tpu7x:2x2x1
jax: 0.10.0
libtpu: 0.0.40
codegen_flags: <defaults>
</compile_context>

<pallas_src>
import functools
import math

import jax
import jax.numpy as jnp
from jax.experimental import pallas as pl
from jax.experimental.pallas import tpu as pltpu

# ---------------- problem sizes (ConnectX: 6x7 board, 7 actions) ------------
INPUT_SIZE = 42           # 6 * 7 board
ACTION_STATES = 7
DIMS = [INPUT_SIZE, 50, 100, 150, 100, 50, ACTION_STATES]

LANE = 128
W_ROWS, W_COLS = 512, 256          # single packed bf16 weight slab (256 KiB)

# Per-layer region inside the weight slab: (row_off, col_off, padded_K, padded_N).
# Regions are disjoint; everything outside the true (fan_in, fan_out) data is 0,
# which is what makes the zero-padded lanes propagate zeros through every layer.
W_REGIONS = [
    (0,   128, 128, 128),   # l1  (42  -> 50)
    (128, 128, 128, 128),   # l2  (50  -> 100)
    (256,   0, 128, 256),   # l3  (100 -> 150)  fused 256-wide output tile
    (0,     0, 256, 128),   # l4  (150 -> 100)  fused 256-wide contraction tile
    (384,   0, 128, 128),   # l5  (100 -> 50)
    (384, 128, 128, 128),   # l6  (50  -> 7)
]


# ---------------------------- Pallas kernel ---------------------------------
def dqn_kernel(x_ref, w_ref, b_ref, o_ref, xpad_ref):
    """Fused 6-layer MLP.

    x_ref:    (B, 42)  f32/bf16  -- raw board features (no wrapper-side padding)
    w_ref:    (512, 256) bf16    -- packed weight slab (see W_REGIONS)
    b_ref:    (8, 256)  f32      -- packed biases, row i = layer i (padding == 0)
    o_ref:    (B, 128)  bf16     -- output, valid Q-values in cols [:7]
    xpad_ref: (B, 128)  bf16     -- VMEM scratch used to zero-pad 42 -> 128 lanes
    """
    # In-kernel zero-pad + bf16 cast (no HBM round trip for a padded copy).
    xpad_ref[...] = jnp.zeros_like(xpad_ref)
    xpad_ref[:, :INPUT_SIZE] = x_ref[...].astype(jnp.bfloat16)
    h = xpad_ref[...]                                        # (B, 128) bf16

    for li, (r0, c0, kr, kc) in enumerate(W_REGIONS):
        w = w_ref[pl.ds(r0, kr), pl.ds(c0, kc)]              # aligned static slice
        acc = jnp.dot(h, w, preferred_element_type=jnp.float32)   # MXU, f32 acc
        acc = acc + b_ref[pl.ds(li, 1), pl.ds(0, kc)]        # (1, kc) bias row
        if li < len(W_REGIONS) - 1:
            # ReLU in f32, then store/carry the activation as bf16.
            h = jnp.maximum(acc, 0.0).astype(jnp.bfloat16)
        else:
            # Final layer: no ReLU; lane-dense bf16 writeback.
            o_ref[...] = acc.astype(jnp.bfloat16)
    # TODO(synk): nn.Dropout is identity here (p=0 / eval); no kernel op emitted.


# ---------------------------- wrapper ----------------------------------------
@functools.partial(jax.jit, static_argnames=("batch_tile", "gridless_max"))
def dqn_forward(x, w_slab, b_slab, *, batch_tile=1024, gridless_max=2048):
    """x: (batch, 42) float. Returns (batch, 7) float32 Q-values."""
    batch = x.shape[0]

    if batch <= gridless_max:
        # Small/medium batch: single invocation, no grid, everything in VMEM.
        # TODO(synk): for repeated tiny-batch inference the 256 KiB weight DMA
        # dominates; a cross-call prefetch (semaphore + VMEM ref handed forward)
        # would amortize it, but is out of scope for this self-contained script.
        out = pl.pallas_call(
            dqn_kernel,
            out_shape=jax.ShapeDtypeStruct((batch, LANE), jnp.bfloat16),
            in_specs=[pl.BlockSpec(memory_space=pltpu.MemorySpace.VMEM)] * 3,
            out_specs=pl.BlockSpec(memory_space=pltpu.MemorySpace.VMEM),
            scratch_shapes=[pltpu.VMEM((batch, LANE), jnp.bfloat16)],
        )(x, w_slab, b_slab)
        return out[:, :ACTION_STATES].astype(jnp.float32)

    # Large batch: parallel grid over 1024-row tiles (on v7x keep n_tiles a
    # multiple of 2 so both TensorCores are fed); weights/biases stay resident
    # across tiles via constant index_maps.
    n_tiles = pl.cdiv(batch, batch_tile)
    padded = n_tiles * batch_tile
    if padded != batch:
        # TODO(synk): prefer batch sizes divisible by batch_tile; this pad is an
        # extra whole-input HBM copy outside the kernel.
        x = jnp.pad(x, ((0, padded - batch), (0, 0)))

    out = pl.pallas_call(
        dqn_kernel,
        out_shape=jax.ShapeDtypeStruct((padded, LANE), jnp.bfloat16),
        grid=(n_tiles,),
        in_specs=[
            pl.BlockSpec((batch_tile, INPUT_SIZE), lambda i: (i, 0)),   # x tile
            pl.BlockSpec((W_ROWS, W_COLS), lambda i: (0, 0)),           # weights resident
            pl.BlockSpec((8, W_COLS), lambda i: (0, 0)),                # biases resident
        ],
        out_specs=pl.BlockSpec((batch_tile, LANE), lambda i: (i, 0)),
        scratch_shapes=[pltpu.VMEM((batch_tile, LANE), jnp.bfloat16)],
        compiler_params=pltpu.CompilerParams(
            dimension_semantics=("parallel",)),
    )(x, w_slab, b_slab)
    return out[:batch, :ACTION_STATES].astype(jnp.float32)


# ---------------------------- parameter init / packing ----------------------
def init_params(key):
    """PyTorch-style U(-1/sqrt(fan_in), +1/sqrt(fan_in)); W stored as (in, out)."""
    params = []
    for i in range(len(DIMS) - 1):
        fan_in, fan_out = DIMS[i], DIMS[i + 1]
        key, kw, kb = jax.random.split(key, 3)
        bound = 1.0 / math.sqrt(fan_in)
        w = jax.random.uniform(kw, (fan_in, fan_out), jnp.float32, -bound, bound)
        b = jax.random.uniform(kb, (fan_out,), jnp.float32, -bound, bound)
        params.append((w, b))
    return params


def pack_params(params):
    """Pack 6 layers into one (512,256) bf16 weight slab + one (8,256) f32 bias slab."""
    w_slab = jnp.zeros((W_ROWS, W_COLS), jnp.float32)
    b_slab = jnp.zeros((8, W_COLS), jnp.float32)
    w_mask = jnp.zeros((W_ROWS, W_COLS), bool)
    b_mask = jnp.zeros((8, W_COLS), bool)

    for li, ((wi, bi), (r0, c0, kr, kc)) in enumerate(zip(params, W_REGIONS)):
        fi, fo = wi.shape
        assert fi <= kr and fo <= kc, (fi, fo, kr, kc)
        w_slab = w_slab.at[r0:r0 + fi, c0:c0 + fo].set(wi)
        b_slab = b_slab.at[li, :fo].set(bi)
        w_mask = w_mask.at[r0:r0 + fi, c0:c0 + fo].set(True)
        b_mask = b_mask.at[li, :fo].set(True)

    # Correctness invariant: every padded weight/bias entry must be exactly zero,
    # otherwise garbage would leak through the zero-padded lanes + ReLU.
    assert float(jnp.abs(jnp.where(w_mask, 0.0, w_slab)).max()) == 0.0
    assert float(jnp.abs(jnp.where(b_mask, 0.0, b_slab)).max()) == 0.0

    # TODO(synk): on v7x the slab could be stored as fp8 (e4m3) with a per-layer
    # scale folded into the bias to halve the weight DMA; kept bf16 for portability.
    return w_slab.astype(jnp.bfloat16), b_slab


# ---------------------------- reference (plain JAX) --------------------------
def dqn_reference(x, params):
    """Mirrors the kernel's numerics: bf16 weights/activations, f32 accumulate,
    bf16 output."""
    h = x.astype(jnp.bfloat16)
    out = None
    for i, (w, b) in enumerate(params):
        acc = jnp.dot(h, w.astype(jnp.bfloat16),
                      preferred_element_type=jnp.float32) + b
        if i < len(params) - 1:
            h = jnp.maximum(acc, 0.0).astype(jnp.bfloat16)
        else:
            out = acc.astype(jnp.bfloat16)
    return out.astype(jnp.float32)


if __name__ == "__main__":
    key = jax.random.PRNGKey(0)
    key, kx = jax.random.split(key)
    params = init_params(key)
    w_slab, b_slab = pack_params(params)

    # --- small batch: gridless path ------------------------------------------
    x_small = jax.random.normal(kx, (8, INPUT_SIZE), jnp.float32)
    out_small = jax.block_until_ready(dqn_forward(x_small, w_slab, b_slab))
    ref_small = dqn_reference(x_small, params)
    assert out_small.shape == (8, ACTION_STATES), out_small.shape
    assert jnp.allclose(out_small, ref_small, atol=2e-2, rtol=2e-2), (
        float(jnp.max(jnp.abs(out_small - ref_small))))

    # --- exercise the gridded path (force grid via a small gridless_max) -----
    key, kx2 = jax.random.split(key)
    x_big = jax.random.normal(kx2, (2048, INPUT_SIZE), jnp.float32)
    out_big = jax.block_until_ready(
        dqn_forward(x_big, w_slab, b_slab, batch_tile=1024, gridless_max=512))
    ref_big = dqn_reference(x_big, params)
    assert out_big.shape == (2048, ACTION_STATES), out_big.shape
    assert jnp.allclose(out_big, ref_big, atol=2e-2, rtol=2e-2), (
        float(jnp.max(jnp.abs(out_big - ref_big))))

    print("KERNEL_OK")
</pallas_src>

<mosaic_0001>
module attributes {stable_mosaic.version = 11 : i64} {
  func.func @dqn_kernel(%arg0: memref<8x42xf32, #tpu.memory_space<vmem>>, %arg1: memref<512x256xbf16, #tpu.memory_space<vmem>>, %arg2: memref<8x256xf32, #tpu.memory_space<vmem>>, %arg3: memref<8x128xbf16, #tpu.memory_space<vmem>>, %arg4: memref<8x128xbf16, #tpu.memory_space<vmem>>) attributes {dimension_semantics = [], scalar_prefetch = 0 : i64, scratch_operands = 1 : i64, tpu.core_type = #tpu.core_type<tc>} {
    %cst = arith.constant 0.000000e+00 : bf16
    %0 = vector.broadcast %cst : bf16 to vector<8x128xbf16>
    %c0 = arith.constant 0 : index
    %c0_0 = arith.constant 0 : index
    %1 = vector.load %arg4[%c0, %c0_0] : memref<8x128xbf16, #tpu.memory_space<vmem>>, vector<8x128xbf16>
    tpu.vector_store %arg4[%c0, %c0_0], %0 {strides = array<i32>} : memref<8x128xbf16, #tpu.memory_space<vmem>>, vector<8x128xbf16>,
    %c0_1 = arith.constant 0 : index
    %c0_2 = arith.constant 0 : index
    %2 = vector.load %arg0[%c0_1, %c0_2] : memref<8x42xf32, #tpu.memory_space<vmem>>, vector<8x42xf32>
    %3 = arith.truncf %2 : vector<8x42xf32> to vector<8x42xbf16>
    %c0_3 = arith.constant 0 : index
    %c0_4 = arith.constant 0 : index
    %4 = vector.load %arg4[%c0_3, %c0_4] : memref<8x128xbf16, #tpu.memory_space<vmem>>, vector<8x42xbf16>
    tpu.vector_store %arg4[%c0_3, %c0_4], %3 {strides = array<i32>} : memref<8x128xbf16, #tpu.memory_space<vmem>>, vector<8x42xbf16>,
    %c0_5 = arith.constant 0 : index
    %c0_6 = arith.constant 0 : index
    %5 = vector.load %arg4[%c0_5, %c0_6] : memref<8x128xbf16, #tpu.memory_space<vmem>>, vector<8x128xbf16>
    %c0_7 = arith.constant 0 : index
    %c128 = arith.constant 128 : index
    %6 = vector.load %arg1[%c0_7, %c128] : memref<512x256xbf16, #tpu.memory_space<vmem>>, vector<128x128xbf16>
    %cst_8 = arith.constant dense<0.000000e+00> : vector<8x128xf32>
    %7 = tpu.matmul %5, %6, %cst_8 {dimension_numbers = #tpu.dot_dimension_numbers<[1], [0], [0], [1], [0, 0, 1, 1], [], []>} : vector<8x128xbf16>, vector<128x128xbf16>, vector<8x128xf32> -> vector<8x128xf32>
    %c0_9 = arith.constant 0 : index
    %c0_10 = arith.constant 0 : index
    %8 = vector.load %arg2[%c0_9, %c0_10] : memref<8x256xf32, #tpu.memory_space<vmem>>, vector<1x128xf32>
    %9 = vector.broadcast %8 : vector<1x128xf32> to vector<8x128xf32>
    %10 = arith.addf %7, %9 : vector<8x128xf32>
    %cst_11 = arith.constant 0.000000e+00 : f32
    %11 = vector.broadcast %cst_11 : f32 to vector<8x128xf32>
    %12 = arith.maximumf %10, %11 : vector<8x128xf32>
    %13 = arith.truncf %12 : vector<8x128xf32> to vector<8x128xbf16>
    %c128_12 = arith.constant 128 : index
    %c128_13 = arith.constant 128 : index
    %14 = vector.load %arg1[%c128_12, %c128_13] : memref<512x256xbf16, #tpu.memory_space<vmem>>, vector<128x128xbf16>
    %cst_14 = arith.constant dense<0.000000e+00> : vector<8x128xf32>
    %15 = tpu.matmul %13, %14, %cst_14 {dimension_numbers = #tpu.dot_dimension_numbers<[1], [0], [0], [1], [0, 0, 1, 1], [], []>} : vector<8x128xbf16>, vector<128x128xbf16>, vector<8x128xf32> -> vector<8x128xf32>
    %c1 = arith.constant 1 : index
    %c0_15 = arith.constant 0 : index
    %16 = vector.load %arg2[%c1, %c0_15] : memref<8x256xf32, #tpu.memory_space<vmem>>, vector<1x128xf32>
    %17 = vector.broadcast %16 : vector<1x128xf32> to vector<8x128xf32>
    %18 = arith.addf %15, %17 : vector<8x128xf32>
    %cst_16 = arith.constant 0.000000e+00 : f32
    %19 = vector.broadcast %cst_16 : f32 to vector<8x128xf32>
    %20 = arith.maximumf %18, %19 : vector<8x128xf32>
    %21 = arith.truncf %20 : vector<8x128xf32> to vector<8x128xbf16>
    %c256 = arith.constant 256 : index
    %c0_17 = arith.constant 0 : index
    %22 = vector.load %arg1[%c256, %c0_17] : memref<512x256xbf16, #tpu.memory_space<vmem>>, vector<128x256xbf16>
    %cst_18 = arith.constant dense<0.000000e+00> : vector<8x256xf32>
    %23 = tpu.matmul %21, %22, %cst_18 {dimension_numbers = #tpu.dot_dimension_numbers<[1], [0], [0], [1], [0, 0, 1, 1], [], []>} : vector<8x128xbf16>, vector<128x256xbf16>, vector<8x256xf32> -> vector<8x256xf32>
    %c2 = arith.constant 2 : index
    %c0_19 = arith.constant 0 : index
    %24 = vector.load %arg2[%c2, %c0_19] : memref<8x256xf32, #tpu.memory_space<vmem>>, vector<1x256xf32>
    %25 = vector.broadcast %24 : vector<1x256xf32> to vector<8x256xf32>
    %26 = arith.addf %23, %25 : vector<8x256xf32>
    %cst_20 = arith.constant 0.000000e+00 : f32
    %27 = vector.broadcast %cst_20 : f32 to vector<8x256xf32>
    %28 = arith.maximumf %26, %27 : vector<8x256xf32>
    %29 = arith.truncf %28 : vector<8x256xf32> to vector<8x256xbf16>
    %c0_21 = arith.constant 0 : index
    %c0_22 = arith.constant 0 : index
    %30 = vector.load %arg1[%c0_21, %c0_22] : memref<512x256xbf16, #tpu.memory_space<vmem>>, vector<256x128xbf16>
    %cst_23 = arith.constant dense<0.000000e+00> : vector<8x128xf32>
    %31 = tpu.matmul %29, %30, %cst_23 {dimension_numbers = #tpu.dot_dimension_numbers<[1], [0], [0], [1], [0, 0, 1, 1], [], []>} : vector<8x256xbf16>, vector<256x128xbf16>, vector<8x128xf32> -> vector<8x128xf32>
    %c3 = arith.constant 3 : index
    %c0_24 = arith.constant 0 : index
    %32 = vector.load %arg2[%c3, %c0_24] : memref<8x256xf32, #tpu.memory_space<vmem>>, vector<1x128xf32>
    %33 = vector.broadcast %32 : vector<1x128xf32> to vector<8x128xf32>
    %34 = arith.addf %31, %33 : vector<8x128xf32>
    %cst_25 = arith.constant 0.000000e+00 : f32
    %35 = vector.broadcast %cst_25 : f32 to vector<8x128xf32>
    %36 = arith.maximumf %34, %35 : vector<8x128xf32>
    %37 = arith.truncf %36 : vector<8x128xf32> to vector<8x128xbf16>
    %c384 = arith.constant 384 : index
    %c0_26 = arith.constant 0 : index
    %38 = vector.load %arg1[%c384, %c0_26] : memref<512x256xbf16, #tpu.memory_space<vmem>>, vector<128x128xbf16>
    %cst_27 = arith.constant dense<0.000000e+00> : vector<8x128xf32>
    %39 = tpu.matmul %37, %38, %cst_27 {dimension_numbers = #tpu.dot_dimension_numbers<[1], [0], [0], [1], [0, 0, 1, 1], [], []>} : vector<8x128xbf16>, vector<128x128xbf16>, vector<8x128xf32> -> vector<8x128xf32>
    %c4 = arith.constant 4 : index
    %c0_28 = arith.constant 0 : index
    %40 = vector.load %arg2[%c4, %c0_28] : memref<8x256xf32, #tpu.memory_space<vmem>>, vector<1x128xf32>
    %41 = vector.broadcast %40 : vector<1x128xf32> to vector<8x128xf32>
    %42 = arith.addf %39, %41 : vector<8x128xf32>
    %cst_29 = arith.constant 0.000000e+00 : f32
    %43 = vector.broadcast %cst_29 : f32 to vector<8x128xf32>
    %44 = arith.maximumf %42, %43 : vector<8x128xf32>
    %45 = arith.truncf %44 : vector<8x128xf32> to vector<8x128xbf16>
    %c384_30 = arith.constant 384 : index
    %c128_31 = arith.constant 128 : index
    %46 = vector.load %arg1[%c384_30, %c128_31] : memref<512x256xbf16, #tpu.memory_space<vmem>>, vector<128x128xbf16>
    %cst_32 = arith.constant dense<0.000000e+00> : vector<8x128xf32>
    %47 = tpu.matmul %45, %46, %cst_32 {dimension_numbers = #tpu.dot_dimension_numbers<[1], [0], [0], [1], [0, 0, 1, 1], [], []>} : vector<8x128xbf16>, vector<128x128xbf16>, vector<8x128xf32> -> vector<8x128xf32>
    %c5 = arith.constant 5 : index
    %c0_33 = arith.constant 0 : index
    %48 = vector.load %arg2[%c5, %c0_33] : memref<8x256xf32, #tpu.memory_space<vmem>>, vector<1x128xf32>
    %49 = vector.broadcast %48 : vector<1x128xf32> to vector<8x128xf32>
    %50 = arith.addf %47, %49 : vector<8x128xf32>
    %51 = arith.truncf %50 : vector<8x128xf32> to vector<8x128xbf16>
    %c0_34 = arith.constant 0 : index
    %c0_35 = arith.constant 0 : index
    %52 = vector.load %arg3[%c0_34, %c0_35] : memref<8x128xbf16, #tpu.memory_space<vmem>>, vector<8x128xbf16>
    tpu.vector_store %arg3[%c0_34, %c0_35], %51 {strides = array<i32>} : memref<8x128xbf16, #tpu.memory_space<vmem>>, vector<8x128xbf16>,
    return
  }
}

</mosaic_0001>

<llo_original>
// kernel: dqn_forward.1
$region0: #{dqn_forward.1}
  #allocation0 [shape = 'u32[]', space=smem, size = 0x4, offset = 0x4, fixed_abs, tag = 'smem constant byte address 0x4 - core index']
  #allocation1 [shape = 'u32[144,128]{1,0:T(1,128)}', space=vmem, size = 0x12000, scoped, tag = 'internal scratch']
  #allocation2 [shape = 'bf16[8,128]{1,0:T(8,128)(2,1)}', space=vmem, size = 0x800, scoped, tag = 'scratch operand']
  %s0 = inlined_call_operand.hbm [shape: f32[8,42], index: 0, kind: input, shape index: {}]
  %s1 = inlined_call_operand.hbm [shape: bf16[512,256], index: 1, kind: input, shape index: {}]
  %s2 = inlined_call_operand.hbm [shape: f32[8,256], index: 2, kind: input, shape index: {}]
  %s3 = inlined_call_operand.vmem [shape: bf16[8,128], index: 3, kind: output, shape index: {}]
  %s4 = sld [smem:[#allocation0]]
  $region34: #{dqn_forward.1} parent=0
    _
  %s6 = ssub.s32 1, %s4
  %s7 = scalar_select 0, %s6, %s4
  $region1: #{dqn_forward.1} parent=0
    #allocation3 [shape = 'u8[4096]{0}', space=vmem, size = 0x1000, scoped, tag = 'input window, operand 0, single buffered']
    #allocation4 [shape = 's32[1]{0}', space=sflag, size = 0x4, scoped, tag = 'scoped memory for dqn_forward.1']
    #allocation5 [shape = 'u8[262144]{0}', space=vmem, size = 0x40000, scoped, tag = 'input window, operand 1, single buffered']
    #allocation6 [shape = 's32[1]{0}', space=sflag, size = 0x4, scoped, tag = 'scoped memory for dqn_forward.1']
    #allocation7 [shape = 'u8[8192]{0}', space=vmem, size = 0x2000, scoped, tag = 'input window, operand 2, single buffered']
    %8 = vsyncpa [#allocation4], 0
    %9 = vsyncpa [#allocation6], 0
    // Predicated region
    $region2: #{dqn_forward.1} parent=1 // pred_check
      _
    $region3: #{dqn_forward.1} parent=1 // pred_check_branch
      %11 = sbr.rel (0) target = $region5
    $region4: #{dqn_forward.1} parent=1 // pred_region
      %s13 = ssub.s32 128, 128
      %14 = vsyncadd [#allocation4], %s13
      %s16 = sshll.u32 [#allocation3], 4
      %s17 = int_to_ptr.vmem [resolvable:$true] %s16
      %19 = dma.hbm_to_vmem [thread:$0]  %s0, 128, %s17, [#allocation4]
    $region5: #{dqn_forward.1} parent=1 // pred_fallthru
      _
    // Predicated region
    $region6: #{dqn_forward.1} parent=1 // pred_check
      _
    $region7: #{dqn_forward.1} parent=1 // pred_check_branch
      %21 = sbr.rel (0) target = $region9
    $region8: #{dqn_forward.1} parent=1 // pred_region
      %s23 = ssub.s32 8192, 8192
      %24 = vsyncadd [#allocation6], %s23
      %s25 = sshll.u32 [#allocation5], 4
      %s26 = int_to_ptr.vmem [resolvable:$true] %s25
      %31 = dma.hbm_to_vmem [thread:$0]  %s1, 8192, %s26, [#allocation6], 128, 128, 8
    $region9: #{dqn_forward.1} parent=1 // pred_fallthru
      _
    // Predicated region
    $region10: #{dqn_forward.1} parent=1 // pred_check
      _
    $region11: #{dqn_forward.1} parent=1 // pred_check_branch
      %33 = sbr.rel (0) target = $region13
    $region12: #{dqn_forward.1} parent=1 // pred_region
      %s35 = ssub.s32 256, 256
      %36 = vsyncadd [#allocation6], %s35
      %s38 = sshll.u32 [#allocation7], 4
      %s39 = int_to_ptr.vmem [resolvable:$true] %s38
      %41 = dma.hbm_to_vmem [thread:$0]  %s2, 256, %s39, [#allocation6]
    $region13: #{dqn_forward.1} parent=1 // pred_fallthru
      _
    // Predicated region
    $region14: #{dqn_forward.1} parent=1 // pred_check
      _
    $region15: #{dqn_forward.1} parent=1 // pred_check_branch
      %43 = sbr.rel (0) target = $region17
    $region16: #{dqn_forward.1} parent=1 // pred_region
      %44 = dma.done [#allocation4], 128
    $region17: #{dqn_forward.1} parent=1 // pred_fallthru
      _
    // Predicated region
    $region18: #{dqn_forward.1} parent=1 // pred_check
      _
    $region19: #{dqn_forward.1} parent=1 // pred_check_branch
      %46 = sbr.rel (0) target = $region21
    $region20: #{dqn_forward.1} parent=1 // pred_region
      %47 = dma.done [#allocation6], 8192
    $region21: #{dqn_forward.1} parent=1 // pred_fallthru
      _
    // Predicated region
    $region22: #{dqn_forward.1} parent=1 // pred_check
      _
    $region23: #{dqn_forward.1} parent=1 // pred_check_branch
      %49 = sbr.rel (0) target = $region25
    $region24: #{dqn_forward.1} parent=1 // pred_region
      %50 = dma.done [#allocation6], 256
    $region25: #{dqn_forward.1} parent=1 // pred_fallthru
      _
    %52 = vst [vmem:[#allocation2] sm:$0xf] 0
    %v53 = vld [vmem:[#allocation3] sm:$0xff]
    %v54 = vpack.c.bf16 %v53, %v53
    %vm55 = vcmask 338944
    %56 = vst.msk [vmem:[#allocation2] sm:$0xf] %vm55, %v54
    %v57 = vld [vmem:[#allocation2] sm:$0xf]
    %v58 = vld [vmem:[#allocation5 + $0x4] sm:$0xf]
    %v59 = vld [vmem:[#allocation5 + $0xc] sm:$0xf]
    %v60 = vld [vmem:[#allocation5 + $0x14] sm:$0xf]
    %v61 = vld [vmem:[#allocation5 + $0x1c] sm:$0xf]
    %v62 = vld [vmem:[#allocation5 + $0x24] sm:$0xf]
    %v63 = vld [vmem:[#allocation5 + $0x2c] sm:$0xf]
    %v64 = vld [vmem:[#allocation5 + $0x34] sm:$0xf]
    %v65 = vld [vmem:[#allocation5 + $0x3c] sm:$0xf]
    %v66 = vld [vmem:[#allocation5 + $0x44] sm:$0xf]
    %v67 = vld [vmem:[#allocation5 + $0x4c] sm:$0xf]
    %v68 = vld [vmem:[#allocation5 + $0x54] sm:$0xf]
    %v69 = vld [vmem:[#allocation5 + $0x5c] sm:$0xf]
    %v70 = vld [vmem:[#allocation5 + $0x64] sm:$0xf]
    %v71 = vld [vmem:[#allocation5 + $0x6c] sm:$0xf]
    %v72 = vld [vmem:[#allocation5 + $0x74] sm:$0xf]
    %v73 = vld [vmem:[#allocation5 + $0x7c] sm:$0xf]
    %v74 = vld [vmem:[#allocation7] ss:$0 sm:$0xff]
    %v91 = vunpack.c.l.b16 %v58
    %v92 = vunpack.c.l.b16 %v59
    %v93 = vunpack.c.l.b16 %v60
    %v94 = vunpack.c.l.b16 %v61
    %v95 = vunpack.c.l.b16 %v62
    %v96 = vunpack.c.l.b16 %v63
    %v97 = vunpack.c.l.b16 %v64
    %v98 = vunpack.c.l.b16 %v65
    %v99 = vunpack.c.l.b16 %v66
    %v100 = vunpack.c.l.b16 %v67
    %v101 = vunpack.c.l.b16 %v68
    %v102 = vunpack.c.l.b16 %v69
    %v103 = vunpack.c.l.b16 %v70
    %v104 = vunpack.c.l.b16 %v71
    %v105 = vunpack.c.l.b16 %v72
    %v106 = vunpack.c.l.b16 %v73
    %v107 = vpack.c.b16 %v92, %v91
    %v108 = vpack.c.b16 %v94, %v93
    %v109 = vpack.c.b16 %v96, %v95
    %v110 = vpack.c.b16 %v98, %v97
    %v111 = vpack.c.b16 %v100, %v99
    %v112 = vpack.c.b16 %v102, %v101
    %v113 = vpack.c.b16 %v104, %v103
    %v114 = vpack.c.b16 %v106, %v105
    %123 = vmatprep.subr.bf16.mxu0 0
    %124 = vmatpush1.bf16.msra.mxu0 %v107
    %125 = vmatprep.subr.bf16.mxu0 0
    %126 = vmatpush1.bf16.msra.mxu0 %v108
    %127 = vmatprep.subr.bf16.mxu0 0
    %128 = vmatpush1.bf16.msra.mxu0 %v109
    %129 = vmatprep.subr.bf16.mxu0 0
    %130 = vmatpush1.bf16.msra.mxu0 %v110
    %131 = vmatprep.subr.bf16.mxu0 0
    %132 = vmatpush1.bf16.msra.mxu0 %v111
    %133 = vmatprep.subr.bf16.mxu0 0
    %134 = vmatpush1.bf16.msra.mxu0 %v112
    %135 = vmatprep.subr.bf16.mxu0 0
    %136 = vmatpush1.bf16.msra.mxu0 %v113
    %137 = vmatprep.subr.bf16.mxu0 0
    %138 = vmatpush1.bf16.msra.mxu0 %v114
    %139 = vmatprep.subr.bf16.mxu0 0
    %140 = vmatpush1.bf16.msra.mxu0 0
    %141 = vmatprep.subr.bf16.mxu0 0
    %142 = vmatpush1.bf16.msra.mxu0 0
    %143 = vmatprep.subr.bf16.mxu0 0
    %144 = vmatpush1.bf16.msra.mxu0 0
    %145 = vmatprep.subr.bf16.mxu0 0
    %146 = vmatpush1.bf16.msra.mxu0 0
    %147 = vmatprep.subr.bf16.mxu0 0
    %148 = vmatpush1.bf16.msra.mxu0 0
    %149 = vmatprep.subr.bf16.mxu0 0
    %150 = vmatpush1.bf16.msra.mxu0 0
    %151 = vmatprep.subr.bf16.mxu0 0
    %152 = vmatpush1.bf16.msra.mxu0 0
    %153 = vmatprep.subr.bf16.mxu0 0
    %154 = vmatpush1.bf16.msra.mxu0 0
    %155 = vmatprep.mubr.bf16.mxu0 0
    %156 = vmatmul.mubr.bf16.gmra.mrb[0].mxu0 %v57
    %v157 = vpop.f32.mrb[0].mxu0
    %v158 = vadd.f32 %v74, %v157
    %v159 = vpop.f32.mrb[0].mxu0
    %v160 = vpop.f32.mrb[0].mxu0
    %v161 = vpop.f32.mrb[0].mxu0
    %162 = vdwg.mxu0
    %v163 = vmax.f32 %v158, 0.0
    %v164 = vpack.c.bf16 %v163, %v163
    %v165 = vld [vmem:[#allocation5 + $0x84] sm:$0xf]
    %v166 = vld [vmem:[#allocation5 + $0x8c] sm:$0xf]
    %v167 = vld [vmem:[#allocation5 + $0x94] sm:$0xf]
    %v168 = vld [vmem:[#allocation5 + $0x9c] sm:$0xf]
    %v169 = vld [vmem:[#allocation5 + $0xa4] sm:$0xf]
    %v170 = vld [vmem:[#allocation5 + $0xac] sm:$0xf]
    %v171 = vld [vmem:[#allocation5 + $0xb4] sm:$0xf]
    %v172 = vld [vmem:[#allocation5 + $0xbc] sm:$0xf]
    %v173 = vld [vmem:[#allocation5 + $0xc4] sm:$0xf]
    %v174 = vld [vmem:[#allocation5 + $0xcc] sm:$0xf]
    %v175 = vld [vmem:[#allocation5 + $0xd4] sm:$0xf]
    %v176 = vld [vmem:[#allocation5 + $0xdc] sm:$0xf]
    %v177 = vld [vmem:[#allocation5 + $0xe4] sm:$0xf]
    %v178 = vld [vmem:[#allocation5 + $0xec] sm:$0xf]
    %v179 = vld [vmem:[#allocation5 + $0xf4] sm:$0xf]
    %v180 = vld [vmem:[#allocation5 + $0xfc] sm:$0xf]
    %v181 = vld [vmem:[#allocation7 + $0x1] ss:$0 sm:$0xff]
    %v198 = vunpack.c.l.b16 %v165
    %v199 = vunpack.c.l.b16 %v166
    %v200 = vunpack.c.l.b16 %v167
    %v201 = vunpack.c.l.b16 %v168
    %v202 = vunpack.c.l.b16 %v169
    %v203 = vunpack.c.l.b16 %v170
    %v204 = vunpack.c.l.b16 %v171
    %v205 = vunpack.c.l.b16 %v172
    %v206 = vunpack.c.l.b16 %v173
    %v207 = vunpack.c.l.b16 %v174
    %v208 = vunpack.c.l.b16 %v175
    %v209 = vunpack.c.l.b16 %v176
    %v210 = vunpack.c.l.b16 %v177
    %v211 = vunpack.c.l.b16 %v178
    %v212 = vunpack.c.l.b16 %v179
    %v213 = vunpack.c.l.b16 %v180
    %v214 = vpack.c.b16 %v199, %v198
    %v215 = vpack.c.b16 %v201, %v200
    %v216 = vpack.c.b16 %v203, %v202
    %v217 = vpack.c.b16 %v205, %v204
    %v218 = vpack.c.b16 %v207, %v206
    %v219 = vpack.c.b16 %v209, %v208
    %v220 = vpack.c.b16 %v211, %v210
    %v221 = vpack.c.b16 %v213, %v212
    %230 = vmatprep.subr.bf16.mxu0 0
    %231 = vmatpush1.bf16.msra.mxu0 %v214
    %232 = vmatprep.subr.bf16.mxu0 0
    %233 = vmatpush1.bf16.msra.mxu0 %v215
    %234 = vmatprep.subr.bf16.mxu0 0
    %235 = vmatpush1.bf16.msra.mxu0 %v216
    %236 = vmatprep.subr.bf16.mxu0 0
    %237 = vmatpush1.bf16.msra.mxu0 %v217
    %238 = vmatprep.subr.bf16.mxu0 0
    %239 = vmatpush1.bf16.msra.mxu0 %v218
    %240 = vmatprep.subr.bf16.mxu0 0
    %241 = vmatpush1.bf16.msra.mxu0 %v219
    %242 = vmatprep.subr.bf16.mxu0 0
    %243 = vmatpush1.bf16.msra.mxu0 %v220
    %244 = vmatprep.subr.bf16.mxu0 0
    %245 = vmatpush1.bf16.msra.mxu0 %v221
    %246 = vmatprep.subr.bf16.mxu0 0
    %247 = vmatpush1.bf16.msra.mxu0 0
    %248 = vmatprep.subr.bf16.mxu0 0
    %249 = vmatpush1.bf16.msra.mxu0 0
    %250 = vmatprep.subr.bf16.mxu0 0
    %251 = vmatpush1.bf16.msra.mxu0 0
    %252 = vmatprep.subr.bf16.mxu0 0
    %253 = vmatpush1.bf16.msra.mxu0 0
    %254 = vmatprep.subr.bf16.mxu0 0
    %255 = vmatpush1.bf16.msra.mxu0 0
    %256 = vmatprep.subr.bf16.mxu0 0
    %257 = vmatpush1.bf16.msra.mxu0 0
    %258 = vmatprep.subr.bf16.mxu0 0
    %259 = vmatpush1.bf16.msra.mxu0 0
    %260 = vmatprep.subr.bf16.mxu0 0
    %261 = vmatpush1.bf16.msra.mxu0 0
    %262 = vmatprep.mubr.bf16.mxu0 0
    %263 = vmatmul.mubr.bf16.gmra.mrb[0].mxu0 %v164
    %v264 = vpop.f32.mrb[0].mxu0
    %v265 = vadd.f32 %v181, %v264
    %v266 = vpop.f32.mrb[0].mxu0
    %v267 = vpop.f32.mrb[0].mxu0
    %v268 = vpop.f32.mrb[0].mxu0
    %269 = vdwg.mxu0
    %v270 = vmax.f32 %v265, 0.0
    %v271 = vpack.c.bf16 %v270, %v270
    %v272 = vld [vmem:[#allocation5 + $0x100] sm:$0xff]
    %v273 = vld [vmem:[#allocation5 + $0x108] sm:$0xff]
    %v274 = vld [vmem:[#allocation5 + $0x110] sm:$0xff]
    %v275 = vld [vmem:[#allocation5 + $0x118] sm:$0xff]
    %v276 = vld [vmem:[#allocation5 + $0x120] sm:$0xff]
    %v277 = vld [vmem:[#allocation5 + $0x128] sm:$0xff]
    %v278 = vld [vmem:[#allocation5 + $0x130] sm:$0xff]
    %v279 = vld [vmem:[#allocation5 + $0x138] sm:$0xff]
    %v280 = vld [vmem:[#allocation5 + $0x140] sm:$0xff]
    %v281 = vld [vmem:[#allocation5 + $0x148] sm:$0xff]
    %v282 = vld [vmem:[#allocation5 + $0x150] sm:$0xff]
    %v283 = vld [vmem:[#allocation5 + $0x158] sm:$0xff]
    %v284 = vld [vmem:[#allocation5 + $0x160] sm:$0xff]
    %v285 = vld [vmem:[#allocation5 + $0x168] sm:$0xff]
    %v286 = vld [vmem:[#allocation5 + $0x170] sm:$0xff]
    %v287 = vld [vmem:[#allocation5 + $0x178] sm:$0xff]
    %s288 = scalar_lea.vmem [#allocation7], 2
    %v289 = vld [vmem:[%s288] ss:$8 sm:$0x3]
    %v291 = vlaneseq
    %v292 = vshrl.u32 %v291, 7
    %v293 = vsub.s32 0, %v292
    %v294 = vrot.slane %v289, %v293
    %v295 = vlaneseq
    %v296 = vshrl.u32 %v295, 7
    %v297 = vsub.s32 1, %v296
    %v298 = vrot.slane %v289, %v297
    %v317 = vunpack.c.l.b16 %v272
    %v318 = vunpack.c.h.b16 %v272
    %v319 = vunpack.c.l.b16 %v273
    %v320 = vunpack.c.h.b16 %v273
    %v321 = vunpack.c.l.b16 %v274
    %v322 = vunpack.c.h.b16 %v274
    %v323 = vunpack.c.l.b16 %v275
    %v324 = vunpack.c.h.b16 %v275
    %v325 = vunpack.c.l.b16 %v276
    %v326 = vunpack.c.h.b16 %v276
    %v327 = vunpack.c.l.b16 %v277
    %v328 = vunpack.c.h.b16 %v277
    %v329 = vunpack.c.l.b16 %v278
    %v330 = vunpack.c.h.b16 %v278
    %v331 = vunpack.c.l.b16 %v279
    %v332 = vunpack.c.h.b16 %v279
    %v333 = vunpack.c.l.b16 %v280
    %v334 = vunpack.c.h.b16 %v280
    %v335 = vunpack.c.l.b16 %v281
    %v336 = vunpack.c.h.b16 %v281
    %v337 = vunpack.c.l.b16 %v282
    %v338 = vunpack.c.h.b16 %v282
    %v339 = vunpack.c.l.b16 %v283
    %v340 = vunpack.c.h.b16 %v283
    %v341 = vunpack.c.l.b16 %v284
    %v342 = vunpack.c.h.b16 %v284
    %v343 = vunpack.c.l.b16 %v285
    %v344 = vunpack.c.h.b16 %v285
    %v345 = vunpack.c.l.b16 %v286
    %v346 = vunpack.c.h.b16 %v286
    %v347 = vunpack.c.l.b16 %v287
    %v348 = vunpack.c.h.b16 %v287
    %v349 = vpack.c.b16 %v319, %v317
    %v350 = vpack.c.b16 %v320, %v318
    %v351 = vpack.c.b16 %v323, %v321
    %v352 = vpack.c.b16 %v324, %v322
    %v353 = vpack.c.b16 %v327, %v325
    %v354 = vpack.c.b16 %v328, %v326
    %v355 = vpack.c.b16 %v331, %v329
    %v356 = vpack.c.b16 %v332, %v330
    %v357 = vpack.c.b16 %v335, %v333
    %v358 = vpack.c.b16 %v336, %v334
    %v359 = vpack.c.b16 %v339, %v337
    %v360 = vpack.c.b16 %v340, %v338
    %v361 = vpack.c.b16 %v343, %v341
    %v362 = vpack.c.b16 %v344, %v342
    %v363 = vpack.c.b16 %v347, %v345
    %v364 = vpack.c.b16 %v348, %v346
    %381 = vmatprep.subr.bf16.mxu0 %v350
    %382 = vmatpush1.bf16.msra.mxu0 %v349
    %383 = vmatprep.subr.bf16.mxu0 %v352
    %384 = vmatpush1.bf16.msra.mxu0 %v351
    %385 = vmatprep.subr.bf16.mxu0 %v354
    %386 = vmatpush1.bf16.msra.mxu0 %v353
    %387 = vmatprep.subr.bf16.mxu0 %v356
    %388 = vmatpush1.bf16.msra.mxu0 %v355
    %389 = vmatprep.subr.bf16.mxu0 %v358
    %390 = vmatpush1.bf16.msra.mxu0 %v357
    %391 = vmatprep.subr.bf16.mxu0 %v360
    %392 = vmatpush1.bf16.msra.mxu0 %v359
    %393 = vmatprep.subr.bf16.mxu0 %v362
    %394 = vmatpush1.bf16.msra.mxu0 %v361
    %395 = vmatprep.subr.bf16.mxu0 %v364
    %396 = vmatpush1.bf16.msra.mxu0 %v363
    %397 = vmatprep.subr.bf16.mxu0 0
    %398 = vmatpush1.bf16.msra.mxu0 0
    %399 = vmatprep.subr.bf16.mxu0 0
    %400 = vmatpush1.bf16.msra.mxu0 0
    %401 = vmatprep.subr.bf16.mxu0 0
    %402 = vmatpush1.bf16.msra.mxu0 0
    %403 = vmatprep.subr.bf16.mxu0 0
    %404 = vmatpush1.bf16.msra.mxu0 0
    %405 = vmatprep.subr.bf16.mxu0 0
    %406 = vmatpush1.bf16.msra.mxu0 0
    %407 = vmatprep.subr.bf16.mxu0 0
    %408 = vmatpush1.bf16.msra.mxu0 0
    %409 = vmatprep.subr.bf16.mxu0 0
    %410 = vmatpush1.bf16.msra.mxu0 0
    %411 = vmatprep.subr.bf16.mxu0 0
    %412 = vmatpush1.bf16.msra.mxu0 0
    %413 = vmatprep.mubr.bf16.mxu0 0
    %414 = vmatmul.mubr.bf16.gmra.mrb[0].mxu0 %v271
    %v415 = vpop.f32.mrb[0].mxu0
    %v416 = vadd.f32 %v294, %v415
    %v417 = vpop.f32.mrb[0].mxu0
    %v418 = vadd.f32 %v298, %v417
    %v419 = vpop.f32.mrb[0].mxu0
    %v420 = vpop.f32.mrb[0].mxu0
    %421 = vdwg.mxu0
    %v422 = vmax.f32 %v416, 0.0
    %v423 = vmax.f32 %v418, 0.0
    %v424 = vpack.c.bf16 %v422, %v422
    %v425 = vpack.c.bf16 %v423, %v423
    %v426 = vld [vmem:[#allocation5] sm:$0xf]
    %v427 = vld [vmem:[#allocation5 + $0x8] sm:$0xf]
    %v428 = vld [vmem:[#allocation5 + $0x10] sm:$0xf]
    %v429 = vld [vmem:[#allocation5 + $0x18] sm:$0xf]
    %v430 = vld [vmem:[#allocation5 + $0x20] sm:$0xf]
    %v431 = vld [vmem:[#allocation5 + $0x28] sm:$0xf]
    %v432 = vld [vmem:[#allocation5 + $0x30] sm:$0xf]
    %v433 = vld [vmem:[#allocation5 + $0x38] sm:$0xf]
    %v434 = vld [vmem:[#allocation5 + $0x40] sm:$0xf]
    %v435 = vld [vmem:[#allocation5 + $0x48] sm:$0xf]
    %v436 = vld [vmem:[#allocation5 + $0x50] sm:$0xf]
    %v437 = vld [vmem:[#allocation5 + $0x58] sm:$0xf]
    %v438 = vld [vmem:[#allocation5 + $0x60] sm:$0xf]
    %v439 = vld [vmem:[#allocation5 + $0x68] sm:$0xf]
    %v440 = vld [vmem:[#allocation5 + $0x70] sm:$0xf]
    %v441 = vld [vmem:[#allocation5 + $0x78] sm:$0xf]
    %v442 = vld [vmem:[#allocation5 + $0x80] sm:$0xf]
    %v443 = vld [vmem:[#allocation5 + $0x88] sm:$0xf]
    %v444 = vld [vmem:[#allocation5 + $0x90] sm:$0xf]
    %v445 = vld [vmem:[#allocation5 + $0x98] sm:$0xf]
    %v446 = vld [vmem:[#allocation5 + $0xa0] sm:$0xf]
    %v447 = vld [vmem:[#allocation5 + $0xa8] sm:$0xf]
    %v448 = vld [vmem:[#allocation5 + $0xb0] sm:$0xf]
    %v449 = vld [vmem:[#allocation5 + $0xb8] sm:$0xf]
    %v450 = vld [vmem:[#allocation5 + $0xc0] sm:$0xf]
    %v451 = vld [vmem:[#allocation5 + $0xc8] sm:$0xf]
    %v452 = vld [vmem:[#allocation5 + $0xd0] sm:$0xf]
    %v453 = vld [vmem:[#allocation5 + $0xd8] sm:$0xf]
    %v454 = vld [vmem:[#allocation5 + $0xe0] sm:$0xf]
    %v455 = vld [vmem:[#allocation5 + $0xe8] sm:$0xf]
    %v456 = vld [vmem:[#allocation5 + $0xf0] sm:$0xf]
    %v457 = vld [vmem:[#allocation5 + $0xf8] sm:$0xf]
    %v458 = vld [vmem:[#allocation7 + $0x3] ss:$0 sm:$0xff]
    %v491 = vunpack.c.l.b16 %v426
    %v492 = vunpack.c.l.b16 %v427
    %v493 = vunpack.c.l.b16 %v428
    %v494 = vunpack.c.l.b16 %v429
    %v495 = vunpack.c.l.b16 %v430
    %v496 = vunpack.c.l.b16 %v431
    %v497 = vunpack.c.l.b16 %v432
    %v498 = vunpack.c.l.b16 %v433
    %v499 = vunpack.c.l.b16 %v434
    %v500 = vunpack.c.l.b16 %v435
    %v501 = vunpack.c.l.b16 %v436
    %v502 = vunpack.c.l.b16 %v437
    %v503 = vunpack.c.l.b16 %v438
    %v504 = vunpack.c.l.b16 %v439
    %v505 = vunpack.c.l.b16 %v440
    %v506 = vunpack.c.l.b16 %v441
    %v507 = vunpack.c.l.b16 %v442
    %v508 = vunpack.c.l.b16 %v443
    %v509 = vunpack.c.l.b16 %v444
    %v510 = vunpack.c.l.b16 %v445
    %v511 = vunpack.c.l.b16 %v446
    %v512 = vunpack.c.l.b16 %v447
    %v513 = vunpack.c.l.b16 %v448
    %v514 = vunpack.c.l.b16 %v449
    %v515 = vunpack.c.l.b16 %v450
    %v516 = vunpack.c.l.b16 %v451
    %v517 = vunpack.c.l.b16 %v452
    %v518 = vunpack.c.l.b16 %v453
    %v519 = vunpack.c.l.b16 %v454
    %v520 = vunpack.c.l.b16 %v455
    %v521 = vunpack.c.l.b16 %v456
    %v522 = vunpack.c.l.b16 %v457
    %v523 = vpack.c.b16 %v492, %v491
    %v524 = vpack.c.b16 %v494, %v493
    %v525 = vpack.c.b16 %v496, %v495
    %v526 = vpack.c.b16 %v498, %v497
    %v527 = vpack.c.b16 %v500, %v499
    %v528 = vpack.c.b16 %v502, %v501
    %v529 = vpack.c.b16 %v504, %v503
    %v530 = vpack.c.b16 %v506, %v505
    %v531 = vpack.c.b16 %v508, %v507
    %v532 = vpack.c.b16 %v510, %v509
    %v533 = vpack.c.b16 %v512, %v511
    %v534 = vpack.c.b16 %v514, %v513
    %v535 = vpack.c.b16 %v516, %v515
    %v536 = vpack.c.b16 %v518, %v517
    %v537 = vpack.c.b16 %v520, %v519
    %v538 = vpack.c.b16 %v522, %v521
    %555 = vmatprep.subr.bf16.mxu0 0
    %556 = vmatpush1.bf16.msra.mxu0 %v523
    %557 = vmatprep.subr.bf16.mxu0 0
    %558 = vmatpush1.bf16.msra.mxu0 %v524
    %559 = vmatprep.subr.bf16.mxu0 0
    %560 = vmatpush1.bf16.msra.mxu0 %v525
    %561 = vmatprep.subr.bf16.mxu0 0
    %562 = vmatpush1.bf16.msra.mxu0 %v526
    %563 = vmatprep.subr.bf16.mxu0 0
    %564 = vmatpush1.bf16.msra.mxu0 %v527
    %565 = vmatprep.subr.bf16.mxu0 0
    %566 = vmatpush1.bf16.msra.mxu0 %v528
    %567 = vmatprep.subr.bf16.mxu0 0
    %568 = vmatpush1.bf16.msra.mxu0 %v529
    %569 = vmatprep.subr.bf16.mxu0 0
    %570 = vmatpush1.bf16.msra.mxu0 %v530
    %571 = vmatprep.subr.bf16.mxu0 0
    %572 = vmatpush1.bf16.msra.mxu0 %v531
    %573 = vmatprep.subr.bf16.mxu0 0
    %574 = vmatpush1.bf16.msra.mxu0 %v532
    %575 = vmatprep.subr.bf16.mxu0 0
    %576 = vmatpush1.bf16.msra.mxu0 %v533
    %577 = vmatprep.subr.bf16.mxu0 0
    %578 = vmatpush1.bf16.msra.mxu0 %v534
    %579 = vmatprep.subr.bf16.mxu0 0
    %580 = vmatpush1.bf16.msra.mxu0 %v535
    %581 = vmatprep.subr.bf16.mxu0 0
    %582 = vmatpush1.bf16.msra.mxu0 %v536
    %583 = vmatprep.subr.bf16.mxu0 0
    %584 = vmatpush1.bf16.msra.mxu0 %v537
    %585 = vmatprep.subr.bf16.mxu0 0
    %586 = vmatpush1.bf16.msra.mxu0 %v538
    %587 = vmatprep.mubr.bf16.mxu0 %v425
    %588 = vmatmul.mubr.bf16.gmra.mrb[0].mxu0 %v424
    %v589 = vpop.f32.mrb[0].mxu0
    %v590 = vadd.f32 %v458, %v589
    %v591 = vpop.f32.mrb[0].mxu0
    %v592 = vpop.f32.mrb[0].mxu0
    %v593 = vpop.f32.mrb[0].mxu0
    %594 = vdwg.mxu0
    %v595 = vmax.f32 %v590, 0.0
    %v596 = vpack.c.bf16 %v595, %v595
    %v597 = vld [vmem:[#allocation5 + $0x180] sm:$0xf]
    %v598 = vld [vmem:[#allocation5 + $0x188] sm:$0xf]
    %v599 = vld [vmem:[#allocation5 + $0x190] sm:$0xf]
    %v600 = vld [vmem:[#allocation5 + $0x198] sm:$0xf]
    %v601 = vld [vmem:[#allocation5 + $0x1a0] sm:$0xf]
    %v602 = vld [vmem:[#allocation5 + $0x1a8] sm:$0xf]
    %v603 = vld [vmem:[#allocation5 + $0x1b0] sm:$0xf]
    %v604 = vld [vmem:[#allocation5 + $0x1b8] sm:$0xf]
    %v605 = vld [vmem:[#allocation5 + $0x1c0] sm:$0xf]
    %v606 = vld [vmem:[#allocation5 + $0x1c8] sm:$0xf]
    %v607 = vld [vmem:[#allocation5 + $0x1d0] sm:$0xf]
    %v608 = vld [vmem:[#allocation5 + $0x1d8] sm:$0xf]
    %v609 = vld [vmem:[#allocation5 + $0x1e0] sm:$0xf]
    %v610 = vld [vmem:[#allocation5 + $0x1e8] sm:$0xf]
    %v611 = vld [vmem:[#allocation5 + $0x1f0] sm:$0xf]
    %v612 = vld [vmem:[#allocation5 + $0x1f8] sm:$0xf]
    %v613 = vld [vmem:[#allocation7 + $0x4] ss:$0 sm:$0xff]
    %v630 = vunpack.c.l.b16 %v597
    %v631 = vunpack.c.l.b16 %v598
    %v632 = vunpack.c.l.b16 %v599
    %v633 = vunpack.c.l.b16 %v600
    %v634 = vunpack.c.l.b16 %v601
    %v635 = vunpack.c.l.b16 %v602
    %v636 = vunpack.c.l.b16 %v603
    %v637 = vunpack.c.l.b16 %v604
    %v638 = vunpack.c.l.b16 %v605
    %v639 = vunpack.c.l.b16 %v606
    %v640 = vunpack.c.l.b16 %v607
    %v641 = vunpack.c.l.b16 %v608
    %v642 = vunpack.c.l.b16 %v609
    %v643 = vunpack.c.l.b16 %v610
    %v644 = vunpack.c.l.b16 %v611
    %v645 = vunpack.c.l.b16 %v612
    %v646 = vpack.c.b16 %v631, %v630
    %v647 = vpack.c.b16 %v633, %v632
    %v648 = vpack.c.b16 %v635, %v634
    %v649 = vpack.c.b16 %v637, %v636
    %v650 = vpack.c.b16 %v639, %v638
    %v651 = vpack.c.b16 %v641, %v640
    %v652 = vpack.c.b16 %v643, %v642
    %v653 = vpack.c.b16 %v645, %v644
    %662 = vmatprep.subr.bf16.mxu0 0
    %663 = vmatpush1.bf16.msra.mxu0 %v646
    %664 = vmatprep.subr.bf16.mxu0 0
    %665 = vmatpush1.bf16.msra.mxu0 %v647
    %666 = vmatprep.subr.bf16.mxu0 0
    %667 = vmatpush1.bf16.msra.mxu0 %v648
    %668 = vmatprep.subr.bf16.mxu0 0
    %669 = vmatpush1.bf16.msra.mxu0 %v649
    %670 = vmatprep.subr.bf16.mxu0 0
    %671 = vmatpush1.bf16.msra.mxu0 %v650
    %672 = vmatprep.subr.bf16.mxu0 0
    %673 = vmatpush1.bf16.msra.mxu0 %v651
    %674 = vmatprep.subr.bf16.mxu0 0
    %675 = vmatpush1.bf16.msra.mxu0 %v652
    %676 = vmatprep.subr.bf16.mxu0 0
    %677 = vmatpush1.bf16.msra.mxu0 %v653
    %678 = vmatprep.subr.bf16.mxu0 0
    %679 = vmatpush1.bf16.msra.mxu0 0
    %680 = vmatprep.subr.bf16.mxu0 0
    %681 = vmatpush1.bf16.msra.mxu0 0
    %682 = vmatprep.subr.bf16.mxu0 0
    %683 = vmatpush1.bf16.msra.mxu0 0
    %684 = vmatprep.subr.bf16.mxu0 0
    %685 = vmatpush1.bf16.msra.mxu0 0
    %686 = vmatprep.subr.bf16.mxu0 0
    %687 = vmatpush1.bf16.msra.mxu0 0
    %688 = vmatprep.subr.bf16.mxu0 0
    %689 = vmatpush1.bf16.msra.mxu0 0
    %690 = vmatprep.subr.bf16.mxu0 0
    %691 = vmatpush1.bf16.msra.mxu0 0
    %692 = vmatprep.subr.bf16.mxu0 0
    %693 = vmatpush1.bf16.msra.mxu0 0
    %694 = vmatprep.mubr.bf16.mxu0 0
    %695 = vmatmul.mubr.bf16.gmra.mrb[0].mxu0 %v596
    %v696 = vpop.f32.mrb[0].mxu0
    %v697 = vadd.f32 %v613, %v696
    %v698 = vpop.f32.mrb[0].mxu0
    %v699 = vpop.f32.mrb[0].mxu0
    %v700 = vpop.f32.mrb[0].mxu0
    %701 = vdwg.mxu0
    %v702 = vmax.f32 %v697, 0.0
    %v703 = vpack.c.bf16 %v702, %v702
    %v704 = vld [vmem:[#allocation5 + $0x184] sm:$0xf]
    %v705 = vld [vmem:[#allocation5 + $0x18c] sm:$0xf]
    %v706 = vld [vmem:[#allocation5 + $0x194] sm:$0xf]
    %v707 = vld [vmem:[#allocation5 + $0x19c] sm:$0xf]
    %v708 = vld [vmem:[#allocation5 + $0x1a4] sm:$0xf]
    %v709 = vld [vmem:[#allocation5 + $0x1ac] sm:$0xf]
    %v710 = vld [vmem:[#allocation5 + $0x1b4] sm:$0xf]
    %v711 = vld [vmem:[#allocation5 + $0x1bc] sm:$0xf]
    %v712 = vld [vmem:[#allocation5 + $0x1c4] sm:$0xf]
    %v713 = vld [vmem:[#allocation5 + $0x1cc] sm:$0xf]
    %v714 = vld [vmem:[#allocation5 + $0x1d4] sm:$0xf]
    %v715 = vld [vmem:[#allocation5 + $0x1dc] sm:$0xf]
    %v716 = vld [vmem:[#allocation5 + $0x1e4] sm:$0xf]
    %v717 = vld [vmem:[#allocation5 + $0x1ec] sm:$0xf]
    %v718 = vld [vmem:[#allocation5 + $0x1f4] sm:$0xf]
    %v719 = vld [vmem:[#allocation5 + $0x1fc] sm:$0xf]
    %v720 = vld [vmem:[#allocation7 + $0x5] ss:$0 sm:$0xff]
    %v737 = vunpack.c.l.b16 %v704
    %v738 = vunpack.c.l.b16 %v705
    %v739 = vunpack.c.l.b16 %v706
    %v740 = vunpack.c.l.b16 %v707
    %v741 = vunpack.c.l.b16 %v708
    %v742 = vunpack.c.l.b16 %v709
    %v743 = vunpack.c.l.b16 %v710
    %v744 = vunpack.c.l.b16 %v711
    %v745 = vunpack.c.l.b16 %v712
    %v746 = vunpack.c.l.b16 %v713
    %v747 = vunpack.c.l.b16 %v714
    %v748 = vunpack.c.l.b16 %v715
    %v749 = vunpack.c.l.b16 %v716
    %v750 = vunpack.c.l.b16 %v717
    %v751 = vunpack.c.l.b16 %v718
    %v752 = vunpack.c.l.b16 %v719
    %v753 = vpack.c.b16 %v738, %v737
    %v754 = vpack.c.b16 %v740, %v739
    %v755 = vpack.c.b16 %v742, %v741
    %v756 = vpack.c.b16 %v744, %v743
    %v757 = vpack.c.b16 %v746, %v745
    %v758 = vpack.c.b16 %v748, %v747
    %v759 = vpack.c.b16 %v750, %v749
    %v760 = vpack.c.b16 %v752, %v751
    %769 = vmatprep.subr.bf16.mxu0 0
    %770 = vmatpush1.bf16.msra.mxu0 %v753
    %771 = vmatprep.subr.bf16.mxu0 0
    %772 = vmatpush1.bf16.msra.mxu0 %v754
    %773 = vmatprep.subr.bf16.mxu0 0
    %774 = vmatpush1.bf16.msra.mxu0 %v755
    %775 = vmatprep.subr.bf16.mxu0 0
    %776 = vmatpush1.bf16.msra.mxu0 %v756
    %777 = vmatprep.subr.bf16.mxu0 0
    %778 = vmatpush1.bf16.msra.mxu0 %v757
    %779 = vmatprep.subr.bf16.mxu0 0
    %780 = vmatpush1.bf16.msra.mxu0 %v758
    %781 = vmatprep.subr.bf16.mxu0 0
    %782 = vmatpush1.bf16.msra.mxu0 %v759
    %783 = vmatprep.subr.bf16.mxu0 0
    %784 = vmatpush1.bf16.msra.mxu0 %v760
    %785 = vmatprep.subr.bf16.mxu0 0
    %786 = vmatpush1.bf16.msra.mxu0 0
    %787 = vmatprep.subr.bf16.mxu0 0
    %788 = vmatpush1.bf16.msra.mxu0 0
    %789 = vmatprep.subr.bf16.mxu0 0
    %790 = vmatpush1.bf16.msra.mxu0 0
    %791 = vmatprep.subr.bf16.mxu0 0
    %792 = vmatpush1.bf16.msra.mxu0 0
    %793 = vmatprep.subr.bf16.mxu0 0
    %794 = vmatpush1.bf16.msra.mxu0 0
    %795 = vmatprep.subr.bf16.mxu0 0
    %796 = vmatpush1.bf16.msra.mxu0 0
    %797 = vmatprep.subr.bf16.mxu0 0
    %798 = vmatpush1.bf16.msra.mxu0 0
    %799 = vmatprep.subr.bf16.mxu0 0
    %800 = vmatpush1.bf16.msra.mxu0 0
    %801 = vmatprep.mubr.bf16.mxu0 0
    %802 = vmatmul.mubr.bf16.gmra.mrb[0].mxu0 %v703
    %v803 = vpop.f32.mrb[0].mxu0
    %v804 = vadd.f32 %v720, %v803
    %v805 = vpop.f32.mrb[0].mxu0
    %v806 = vpop.f32.mrb[0].mxu0
    %v807 = vpop.f32.mrb[0].mxu0
    %808 = vdwg.mxu0
    %v809 = vpack.c.bf16 %v804, %v804
    %810 = vst [vmem:[%s3] sm:$0xf] %v809
    // Predicated region
    $region26: #{dqn_forward.1} parent=1 // pred_check
      _
    $region27: #{dqn_forward.1} parent=1 // pred_check_branch
      %812 = sbr.rel (0) target = $region29
    $region28: #{dqn_forward.1} parent=1 // pred_region
      _
    $region29: #{dqn_forward.1} parent=1 // pred_fallthru
      _
    // Predicated region
    $region30: #{dqn_forward.1} parent=1 // pred_check
      _
    $region31: #{dqn_forward.1} parent=1 // pred_check_branch
      %814 = sbr.rel (0) target = $region33
    $region32: #{dqn_forward.1} parent=1 // pred_region
      _
    $region33: #{dqn_forward.1} parent=1 // pred_fallthru
      _
    %815 = vsyncpa [#allocation4], 1
    %816 = vsyncpa [#allocation6], 1

</llo_original>
